<compile_context>
chip_gen: v6e
topology: v6e:2x2x1
jax: 0.10.0
libtpu: 0.0.40
codegen_flags: <defaults>
</compile_context>

<pallas_src>
import functools

import jax
import jax.numpy as jnp
from jax import lax
from jax.experimental import pallas as pl
from jax.experimental.pallas import tpu as pltpu


def _round_up(x, m):
    return (x + m - 1) // m * m


def _cdiv(a, b):
    return (a + b - 1) // b


def _vmem_capacity_bytes():
    """Best-effort per-core VMEM capacity; conservative fallback (v7x = 64 MiB)."""
    try:
        info = pltpu.get_tpu_info()
        cap = getattr(info, "vmem_capacity_bytes", None)
        if cap:
            return int(cap)
    except Exception:
        pass
    return 64 << 20


# ---------------------------------------------------------------------------
# Kernels
# ---------------------------------------------------------------------------
def _mlp_fused_kernel(task_ref, x_ref, enc_w_ref, enc_b_ref, hid_w_ref,
                      hid_b_ref, dec_w_ref, dec_b_ref, out_ref, *, depth):
    """Single grid axis over batch tiles; all layers in one kernel body."""
    del task_ref  # consumed only by the BlockSpec index_maps

    # encoder: (bm, I)bf16 @ (I, H)bf16 -> f32 acc, + f32 bias, carry in bf16
    h = (jnp.dot(x_ref[...], enc_w_ref[...],
                 preferred_element_type=jnp.float32) + enc_b_ref[...])
    h = h.astype(jnp.bfloat16)

    # hidden stack: Linear + ReLU (+ Dropout(0.5) == identity at inference)
    if depth <= 16:
        for i in range(depth):  # static unroll: best LLO scheduling for small depth
            a = (jnp.dot(h, hid_w_ref[i], preferred_element_type=jnp.float32)
                 + hid_b_ref[i])
            h = jnp.maximum(a, 0.0).astype(jnp.bfloat16)
    else:
        def body(i, hc):
            a = (jnp.dot(hc, hid_w_ref[i], preferred_element_type=jnp.float32)
                 + hid_b_ref[i])
            return jnp.maximum(a, 0.0).astype(jnp.bfloat16)
        h = lax.fori_loop(0, depth, body, h)

    # decoder (lane-dense padded output -> unmasked vector stores)
    out_ref[...] = (jnp.dot(h, dec_w_ref[...],
                            preferred_element_type=jnp.float32)
                    + dec_b_ref[...]).astype(out_ref.dtype)


def _mlp_streamed_kernel(task_ref, x_ref, enc_w_ref, enc_b_ref, hid_w_ref,
                         hid_b_ref, dec_w_ref, dec_b_ref, out_ref, h_ref,
                         *, depth):
    """Fallback: hidden weights streamed one slab per grid step (layer axis)."""
    del task_ref
    k = pl.program_id(1)  # 0 = encoder, 1..depth = hidden, depth+1 = decoder

    @pl.when(k == 0)
    def _encoder():
        h_ref[...] = (jnp.dot(x_ref[...], enc_w_ref[...],
                              preferred_element_type=jnp.float32)
                      + enc_b_ref[...]).astype(h_ref.dtype)

    @pl.when(jnp.logical_and(k >= 1, k <= depth))
    def _hidden():
        a = (jnp.dot(h_ref[...], hid_w_ref[...],
                     preferred_element_type=jnp.float32) + hid_b_ref[...])
        h_ref[...] = jnp.maximum(a, 0.0).astype(h_ref.dtype)

    @pl.when(k == depth + 1)
    def _decoder():
        out_ref[...] = (jnp.dot(h_ref[...], dec_w_ref[...],
                                preferred_element_type=jnp.float32)
                        + dec_b_ref[...]).astype(out_ref.dtype)


# ---------------------------------------------------------------------------
# Wrapper
# ---------------------------------------------------------------------------
def prepare_params(params):
    """One-time layout/dtype prep (hoisted out of the per-call path).

    Weights -> bf16 (MXU operands), biases -> f32 row-vectors, decoder padded
    to a 128-lane-dense slab. Returns (prepared_dict, num_outputs).
    """
    num_tasks, i_size, H = params["enc_w"].shape
    num_outputs = params["dec_w"].shape[2]
    o_pad = _round_up(max(num_outputs, 1), 128)
    dec_w = jnp.zeros((num_tasks, H, o_pad), jnp.bfloat16).at[
        :, :, :num_outputs].set(params["dec_w"].astype(jnp.bfloat16))
    dec_b = jnp.zeros((num_tasks, 1, o_pad), jnp.float32).at[
        :, :, :num_outputs].set(params["dec_b"][:, None, :].astype(jnp.float32))
    prepared = {
        "enc_w": params["enc_w"].astype(jnp.bfloat16),          # (T, I, H)
        "enc_b": params["enc_b"][:, None, :].astype(jnp.float32),  # (T, 1, H)
        "hid_w": params["hid_w"].astype(jnp.bfloat16),          # (D, H, H)
        "hid_b": params["hid_b"][:, None, :].astype(jnp.float32),  # (D, 1, H)
        "dec_w": dec_w,                                          # (T, H, O_pad)
        "dec_b": dec_b,                                          # (T, 1, O_pad)
    }
    return prepared, num_outputs


@functools.partial(jax.jit, static_argnames=("num_outputs",))
def mlp_forward(x, prepared, task_id, *, num_outputs):
    """x: (B, i_size) float32; prepared: output of prepare_params; task_id: int."""
    num_tasks, i_size, H = prepared["enc_w"].shape
    depth = prepared["hid_w"].shape[0]
    o_pad = prepared["dec_w"].shape[2]
    B = x.shape[0]

    # --- batch tiling: minimize padding; keep >=2 tiles for big batches so both
    #     v7x TensorCores get work (harmless single-TC chips). ---
    cap = 512
    n_tiles = _cdiv(B, cap)
    if B >= 256 and n_tiles < 2:
        n_tiles = 2
    bm = _round_up(_cdiv(B, n_tiles), 8)
    b_pad = bm * n_tiles

    x_p = jnp.zeros((b_pad, i_size), jnp.bfloat16).at[:B].set(
        x.astype(jnp.bfloat16))
    task = jnp.asarray(task_id, dtype=jnp.int32).reshape((1,))

    vmem_cap = _vmem_capacity_bytes()
    flops = 2 * b_pad * (i_size * H + depth * H * H + H * o_pad)

    # VMEM needed by the fused path: double-buffered in/out blocks + full stack.
    fused_bytes = 2 * (bm * i_size * 2 + i_size * H * 2 + H * 4
                       + depth * H * H * 2 + depth * H * 4
                       + H * o_pad * 2 + o_pad * 4
                       + bm * o_pad * 4)
    use_fused = fused_bytes <= int(0.8 * vmem_cap)

    if use_fused:
        kernel = functools.partial(_mlp_fused_kernel, depth=depth)
        bytes_accessed = int(
            b_pad * i_size * 2
            + i_size * H * 2 + H * 4
            + depth * (H * H * 2 + H * 4)
            + H * o_pad * 2 + o_pad * 4
            + b_pad * o_pad * 4)
        vmem_limit = int(min(max(2 * fused_bytes, 4 << 20), int(0.9 * vmem_cap)))

        out_padded = pl.pallas_call(
            kernel,
            out_shape=jax.ShapeDtypeStruct((b_pad, o_pad), jnp.float32),
            grid_spec=pltpu.PrefetchScalarGridSpec(
                num_scalar_prefetch=1,
                grid=(n_tiles,),
                in_specs=[
                    pl.BlockSpec((bm, i_size), lambda b, t: (b, 0)),       # x
                    pl.BlockSpec((None, i_size, H), lambda b, t: (t[0], 0, 0)),
                    pl.BlockSpec((None, 1, H), lambda b, t: (t[0], 0, 0)),
                    pl.BlockSpec((depth, H, H), lambda b, t: (0, 0, 0)),   # whole stack
                    pl.BlockSpec((depth, 1, H), lambda b, t: (0, 0, 0)),
                    pl.BlockSpec((None, H, o_pad), lambda b, t: (t[0], 0, 0)),
                    pl.BlockSpec((None, 1, o_pad), lambda b, t: (t[0], 0, 0)),
                ],
                out_specs=pl.BlockSpec((bm, o_pad), lambda b, t: (b, 0)),
            ),
            compiler_params=pltpu.CompilerParams(
                dimension_semantics=("parallel",),
                vmem_limit_bytes=vmem_limit),
            cost_estimate=pl.CostEstimate(flops=flops, transcendentals=0,
                                          bytes_accessed=bytes_accessed),
        )(task, x_p, prepared["enc_w"], prepared["enc_b"],
          prepared["hid_w"], prepared["hid_b"],
          prepared["dec_w"], prepared["dec_b"])
    else:
        # Streamed fallback: one (H,H) slab resident at a time; VMEM use is
        # independent of depth.
        # TODO(synk): for H large enough that even one (H,H) slab busts VMEM
        # (H >~ 3.5K on v7x) additionally tile the slab along its output dim.
        kernel = functools.partial(_mlp_streamed_kernel, depth=depth)
        task_idx = lambda b, k, t: (t[0], 0, 0)
        hid_idx = lambda b, k, t: (jnp.clip(k - 1, 0, depth - 1), 0, 0)
        stream_bytes = (2 * (bm * i_size * 2 + i_size * H * 2 + H * 4
                             + H * H * 2 + H * 4
                             + H * o_pad * 2 + o_pad * 4
                             + bm * o_pad * 4)
                        + bm * H * 2)
        vmem_limit = int(min(max(2 * stream_bytes, 4 << 20), int(0.9 * vmem_cap)))
        bytes_accessed = int(
            b_pad * i_size * 2
            + n_tiles * (i_size * H * 2 + H * 4
                         + depth * (H * H * 2 + H * 4)
                         + H * o_pad * 2 + o_pad * 4)   # weights re-read per tile
            + b_pad * o_pad * 4)

        out_padded = pl.pallas_call(
            kernel,
            out_shape=jax.ShapeDtypeStruct((b_pad, o_pad), jnp.float32),
            grid_spec=pltpu.PrefetchScalarGridSpec(
                num_scalar_prefetch=1,
                grid=(n_tiles, depth + 2),
                in_specs=[
                    pl.BlockSpec((bm, i_size), lambda b, k, t: (b, 0)),    # x
                    pl.BlockSpec((None, i_size, H), task_idx),             # enc_w
                    pl.BlockSpec((None, 1, H), task_idx),                  # enc_b
                    pl.BlockSpec((None, H, H), hid_idx),                   # hid_w
                    pl.BlockSpec((None, 1, H), hid_idx),                   # hid_b
                    pl.BlockSpec((None, H, o_pad), task_idx),              # dec_w
                    pl.BlockSpec((None, 1, o_pad), task_idx),              # dec_b
                ],
                out_specs=pl.BlockSpec((bm, o_pad), lambda b, k, t: (b, 0)),
                scratch_shapes=[pltpu.VMEM((bm, H), jnp.bfloat16)],        # carry
            ),
            compiler_params=pltpu.CompilerParams(
                dimension_semantics=("parallel", "arbitrary"),
                vmem_limit_bytes=vmem_limit),
            cost_estimate=pl.CostEstimate(flops=flops, transcendentals=0,
                                          bytes_accessed=bytes_accessed),
        )(task, x_p, prepared["enc_w"], prepared["enc_b"],
          prepared["hid_w"], prepared["hid_b"],
          prepared["dec_w"], prepared["dec_b"])

    return out_padded[:B, :num_outputs]


# ---------------------------------------------------------------------------
# Parameter init + pure-JAX reference
# ---------------------------------------------------------------------------
def init_params(key, i_size, size, depth, num_tasks, num_outputs):
    """Deterministic synthetic parameters (uniform like nn.Linear default)."""
    ks = jax.random.split(key, 6)

    def lin_init(k, fan_in, shape):
        bound = 1.0 / jnp.sqrt(fan_in)
        return jax.random.uniform(k, shape, jnp.float32, -bound, bound)

    return {
        # weights stored (in, out)  (PyTorch nn.Linear stores (out, in))
        "enc_w": lin_init(ks[0], i_size, (num_tasks, i_size, size)),
        "enc_b": lin_init(ks[1], i_size, (num_tasks, size)),
        "hid_w": lin_init(ks[2], size, (depth, size, size)),
        "hid_b": lin_init(ks[3], size, (depth, size)),
        "dec_w": lin_init(ks[4], size, (num_tasks, size, num_outputs)),
        "dec_b": lin_init(ks[5], size, (num_tasks, num_outputs)),
    }


def mlp_ref(x, params, task_id, emulate_bf16=False):
    """Pure-JAX reference (eval mode). Optionally emulates bf16 MXU inputs."""
    if emulate_bf16:
        def dot(a, b):
            return jnp.dot(a.astype(jnp.bfloat16), b.astype(jnp.bfloat16),
                           preferred_element_type=jnp.float32)
    else:
        def dot(a, b):
            return jnp.dot(a, b, preferred_element_type=jnp.float32)

    h = dot(x, params["enc_w"][task_id]) + params["enc_b"][task_id]
    for i in range(params["hid_w"].shape[0]):
        h = jnp.maximum(dot(h, params["hid_w"][i]) + params["hid_b"][i], 0.0)
    return dot(h, params["dec_w"][task_id]) + params["dec_b"][task_id]


if __name__ == "__main__":
    # small shapes consistent with the module (regression=[False] -> 1 output)
    B, i_size, size, depth = 8, 16, 32, 2
    num_tasks, num_outputs = 3, 1
    task_id = 1

    key = jax.random.PRNGKey(0)
    kx, kp = jax.random.split(key)
    x = jax.random.normal(kx, (B, i_size), dtype=jnp.float32)
    params = init_params(kp, i_size, size, depth, num_tasks, num_outputs)

    prepared, n_out = prepare_params(params)   # one-time cast/pad, hoisted
    out = jax.block_until_ready(
        mlp_forward(x, prepared, task_id, num_outputs=n_out))
    assert out.shape == (B, num_outputs)

    # exact-math check against a bf16-input / f32-accumulate reference
    ref_bf16 = mlp_ref(x, params, task_id, emulate_bf16=True)
    assert jnp.allclose(out, ref_bf16, atol=1e-3, rtol=1e-3), (out, ref_bf16)

    # loose check against the full-f32 reference (bf16 rounding tolerance)
    ref_f32 = mlp_ref(x, params, task_id, emulate_bf16=False)
    assert jnp.allclose(out, ref_f32, atol=5e-2, rtol=5e-2), (out, ref_f32)

    print("KERNEL_OK")
</pallas_src>

<mosaic_0001>
module attributes {stable_mosaic.version = 11 : i64} {
  func.func @_mlp_fused_kernel(%arg0: i32, %arg1: memref<1xi32, #tpu.memory_space<smem>>, %arg2: memref<8x16xbf16, #tpu.memory_space<vmem>>, %arg3: memref<1x16x32xbf16, #tpu.memory_space<vmem>>, %arg4: memref<1x1x32xf32, #tpu.memory_space<vmem>>, %arg5: memref<2x32x32xbf16, #tpu.memory_space<vmem>>, %arg6: memref<2x1x32xf32, #tpu.memory_space<vmem>>, %arg7: memref<1x32x128xbf16, #tpu.memory_space<vmem>>, %arg8: memref<1x1x128xf32, #tpu.memory_space<vmem>>, %arg9: memref<8x128xf32, #tpu.memory_space<vmem>>) attributes {dimension_semantics = [#tpu.dimension_semantics<parallel>], iteration_bounds = array<i64: 1>, scalar_prefetch = 1 : i64, scratch_operands = 0 : i64, tpu.core_type = #tpu.core_type<tc>, window_params = [{transform_indices = @transform_0, window_bounds = array<i64: 8, 16>}, {transform_indices = @transform_1, window_bounds = array<i64: 1, 16, 32>}, {transform_indices = @transform_2, window_bounds = array<i64: 1, 1, 32>}, {pipeline_mode = #tpu.pipeline_mode<synchronous>, transform_indices = @transform_3, window_bounds = array<i64: 2, 32, 32>}, {pipeline_mode = #tpu.pipeline_mode<synchronous>, transform_indices = @transform_4, window_bounds = array<i64: 2, 1, 32>}, {transform_indices = @transform_5, window_bounds = array<i64: 1, 32, 128>}, {transform_indices = @transform_6, window_bounds = array<i64: 1, 1, 128>}, {transform_indices = @transform_7, window_bounds = array<i64: 8, 128>}]} {
    %c0 = arith.constant 0 : index
    %c0_0 = arith.constant 0 : index
    %0 = vector.load %arg2[%c0, %c0_0] : memref<8x16xbf16, #tpu.memory_space<vmem>>, vector<8x16xbf16>
    %c0_1 = arith.constant 0 : index
    %c0_2 = arith.constant 0 : index
    %c0_3 = arith.constant 0 : index
    %1 = vector.load %arg3[%c0_1, %c0_2, %c0_3] : memref<1x16x32xbf16, #tpu.memory_space<vmem>>, vector<1x16x32xbf16>
    %2 = vector.shape_cast %1 : vector<1x16x32xbf16> to vector<16x32xbf16>
    %cst = arith.constant dense<0.000000e+00> : vector<8x32xf32>
    %3 = tpu.matmul %0, %2, %cst {dimension_numbers = #tpu.dot_dimension_numbers<[1], [0], [0], [1], [0, 0, 1, 1], [], []>} : vector<8x16xbf16>, vector<16x32xbf16>, vector<8x32xf32> -> vector<8x32xf32>
    %c0_4 = arith.constant 0 : index
    %c0_5 = arith.constant 0 : index
    %c0_6 = arith.constant 0 : index
    %4 = vector.load %arg4[%c0_4, %c0_5, %c0_6] : memref<1x1x32xf32, #tpu.memory_space<vmem>>, vector<1x1x32xf32>
    %5 = vector.shape_cast %4 : vector<1x1x32xf32> to vector<1x32xf32>
    %6 = vector.broadcast %5 : vector<1x32xf32> to vector<8x32xf32>
    %7 = arith.addf %3, %6 : vector<8x32xf32>
    %8 = arith.truncf %7 : vector<8x32xf32> to vector<8x32xbf16>
    %c0_7 = arith.constant 0 : index
    %c0_8 = arith.constant 0 : index
    %c0_9 = arith.constant 0 : index
    %9 = vector.load %arg5[%c0_7, %c0_8, %c0_9] : memref<2x32x32xbf16, #tpu.memory_space<vmem>>, vector<1x32x32xbf16>
    %10 = vector.shape_cast %9 : vector<1x32x32xbf16> to vector<32x32xbf16>
    %cst_10 = arith.constant dense<0.000000e+00> : vector<8x32xf32>
    %11 = tpu.matmul %8, %10, %cst_10 {dimension_numbers = #tpu.dot_dimension_numbers<[1], [0], [0], [1], [0, 0, 1, 1], [], []>} : vector<8x32xbf16>, vector<32x32xbf16>, vector<8x32xf32> -> vector<8x32xf32>
    %c0_11 = arith.constant 0 : index
    %c0_12 = arith.constant 0 : index
    %c0_13 = arith.constant 0 : index
    %12 = vector.load %arg6[%c0_11, %c0_12, %c0_13] : memref<2x1x32xf32, #tpu.memory_space<vmem>>, vector<1x1x32xf32>
    %13 = vector.shape_cast %12 : vector<1x1x32xf32> to vector<1x32xf32>
    %14 = vector.broadcast %13 : vector<1x32xf32> to vector<8x32xf32>
    %15 = arith.addf %11, %14 : vector<8x32xf32>
    %cst_14 = arith.constant 0.000000e+00 : f32
    %16 = vector.broadcast %cst_14 : f32 to vector<8x32xf32>
    %17 = arith.maximumf %15, %16 : vector<8x32xf32>
    %18 = arith.truncf %17 : vector<8x32xf32> to vector<8x32xbf16>
    %c1 = arith.constant 1 : index
    %c0_15 = arith.constant 0 : index
    %c0_16 = arith.constant 0 : index
    %19 = vector.load %arg5[%c1, %c0_15, %c0_16] : memref<2x32x32xbf16, #tpu.memory_space<vmem>>, vector<1x32x32xbf16>
    %20 = vector.shape_cast %19 : vector<1x32x32xbf16> to vector<32x32xbf16>
    %cst_17 = arith.constant dense<0.000000e+00> : vector<8x32xf32>
    %21 = tpu.matmul %18, %20, %cst_17 {dimension_numbers = #tpu.dot_dimension_numbers<[1], [0], [0], [1], [0, 0, 1, 1], [], []>} : vector<8x32xbf16>, vector<32x32xbf16>, vector<8x32xf32> -> vector<8x32xf32>
    %c1_18 = arith.constant 1 : index
    %c0_19 = arith.constant 0 : index
    %c0_20 = arith.constant 0 : index
    %22 = vector.load %arg6[%c1_18, %c0_19, %c0_20] : memref<2x1x32xf32, #tpu.memory_space<vmem>>, vector<1x1x32xf32>
    %23 = vector.shape_cast %22 : vector<1x1x32xf32> to vector<1x32xf32>
    %24 = vector.broadcast %23 : vector<1x32xf32> to vector<8x32xf32>
    %25 = arith.addf %21, %24 : vector<8x32xf32>
    %cst_21 = arith.constant 0.000000e+00 : f32
    %26 = vector.broadcast %cst_21 : f32 to vector<8x32xf32>
    %27 = arith.maximumf %25, %26 : vector<8x32xf32>
    %28 = arith.truncf %27 : vector<8x32xf32> to vector<8x32xbf16>
    %c0_22 = arith.constant 0 : index
    %c0_23 = arith.constant 0 : index
    %c0_24 = arith.constant 0 : index
    %29 = vector.load %arg7[%c0_22, %c0_23, %c0_24] : memref<1x32x128xbf16, #tpu.memory_space<vmem>>, vector<1x32x128xbf16>
    %30 = vector.shape_cast %29 : vector<1x32x128xbf16> to vector<32x128xbf16>
    %cst_25 = arith.constant dense<0.000000e+00> : vector<8x128xf32>
    %31 = tpu.matmul %28, %30, %cst_25 {dimension_numbers = #tpu.dot_dimension_numbers<[1], [0], [0], [1], [0, 0, 1, 1], [], []>} : vector<8x32xbf16>, vector<32x128xbf16>, vector<8x128xf32> -> vector<8x128xf32>
    %c0_26 = arith.constant 0 : index
    %c0_27 = arith.constant 0 : index
    %c0_28 = arith.constant 0 : index
    %32 = vector.load %arg8[%c0_26, %c0_27, %c0_28] : memref<1x1x128xf32, #tpu.memory_space<vmem>>, vector<1x1x128xf32>
    %33 = vector.shape_cast %32 : vector<1x1x128xf32> to vector<1x128xf32>
    %34 = vector.broadcast %33 : vector<1x128xf32> to vector<8x128xf32>
    %35 = arith.addf %31, %34 : vector<8x128xf32>
    %c0_29 = arith.constant 0 : index
    %c0_30 = arith.constant 0 : index
    %36 = vector.load %arg9[%c0_29, %c0_30] : memref<8x128xf32, #tpu.memory_space<vmem>>, vector<8x128xf32>
    tpu.vector_store %arg9[%c0_29, %c0_30], %35 {strides = array<i32>} : memref<8x128xf32, #tpu.memory_space<vmem>>, vector<8x128xf32>,
    return
  }
  func.func @transform_0(%arg0: i32, %arg1: memref<1xi32, #tpu.memory_space<smem>>) -> (i32, i32) {
    %c0_i32 = arith.constant 0 : i32
    %c0_i32_0 = arith.constant 0 : i32
    return %arg0, %c0_i32 : i32, i32
  }
  func.func @transform_1(%arg0: i32, %arg1: memref<1xi32, #tpu.memory_space<smem>>) -> (i32, i32, i32) {
    %c0 = arith.constant 0 : index
    %0 = memref.load %arg1[%c0] : memref<1xi32, #tpu.memory_space<smem>>
    %c0_i32 = arith.constant 0 : i32
    %c0_i32_0 = arith.constant 0 : i32
    %c0_i32_1 = arith.constant 0 : i32
    return %0, %c0_i32, %c0_i32_0 : i32, i32, i32
  }
  func.func @transform_2(%arg0: i32, %arg1: memref<1xi32, #tpu.memory_space<smem>>) -> (i32, i32, i32) {
    %c0 = arith.constant 0 : index
    %0 = memref.load %arg1[%c0] : memref<1xi32, #tpu.memory_space<smem>>
    %c0_i32 = arith.constant 0 : i32
    %c0_i32_0 = arith.constant 0 : i32
    %c0_i32_1 = arith.constant 0 : i32
    return %0, %c0_i32, %c0_i32_0 : i32, i32, i32
  }
  func.func @transform_3(%arg0: i32, %arg1: memref<1xi32, #tpu.memory_space<smem>>) -> (i32, i32, i32) {
    %c0_i32 = arith.constant 0 : i32
    %c0_i32_0 = arith.constant 0 : i32
    %c0_i32_1 = arith.constant 0 : i32
    %c0_i32_2 = arith.constant 0 : i32
    return %c0_i32, %c0_i32_0, %c0_i32_1 : i32, i32, i32
  }
  func.func @transform_4(%arg0: i32, %arg1: memref<1xi32, #tpu.memory_space<smem>>) -> (i32, i32, i32) {
    %c0_i32 = arith.constant 0 : i32
    %c0_i32_0 = arith.constant 0 : i32
    %c0_i32_1 = arith.constant 0 : i32
    %c0_i32_2 = arith.constant 0 : i32
    return %c0_i32, %c0_i32_0, %c0_i32_1 : i32, i32, i32
  }
  func.func @transform_5(%arg0: i32, %arg1: memref<1xi32, #tpu.memory_space<smem>>) -> (i32, i32, i32) {
    %c0 = arith.constant 0 : index
    %0 = memref.load %arg1[%c0] : memref<1xi32, #tpu.memory_space<smem>>
    %c0_i32 = arith.constant 0 : i32
    %c0_i32_0 = arith.constant 0 : i32
    %c0_i32_1 = arith.constant 0 : i32
    return %0, %c0_i32, %c0_i32_0 : i32, i32, i32
  }
  func.func @transform_6(%arg0: i32, %arg1: memref<1xi32, #tpu.memory_space<smem>>) -> (i32, i32, i32) {
    %c0 = arith.constant 0 : index
    %0 = memref.load %arg1[%c0] : memref<1xi32, #tpu.memory_space<smem>>
    %c0_i32 = arith.constant 0 : i32
    %c0_i32_0 = arith.constant 0 : i32
    %c0_i32_1 = arith.constant 0 : i32
    return %0, %c0_i32, %c0_i32_0 : i32, i32, i32
  }
  func.func @transform_7(%arg0: i32, %arg1: memref<1xi32, #tpu.memory_space<smem>>) -> (i32, i32) {
    %c0_i32 = arith.constant 0 : i32
    %c0_i32_0 = arith.constant 0 : i32
    return %arg0, %c0_i32 : i32, i32
  }
}

</mosaic_0001>

<llo_original>
// kernel: mlp_forward.1
$region0: #{mlp_forward.1}
  #allocation0 [shape = 'u32[]', space=smem, size = 0x4, offset = 0x4, fixed_abs, tag = 'smem constant byte address 0x4 - core index']
  #allocation1 [shape = 'u32[144,128]{1,0:T(1,128)}', space=vmem, size = 0x12000, scoped, tag = 'internal scratch']
  #allocation2 [shape = 's32[1]{0}', space=sflag, size = 0x4, scoped, tag = 'scoped memory for mlp_forward.1']
  #allocation3 [shape = 's32[1]{0:T(128)S(6)}', space=smem, size = 0x200, scoped, tag = 'prefetched SMEM operand 0']
  %s0 = inlined_call_operand.<no memory space> [shape: s32[1], index: 0, kind: input, shape index: {}]
  %s1 = inlined_call_operand.vmem [shape: bf16[8,16], index: 1, kind: input, shape index: {}]
  %s2 = inlined_call_operand.hbm [shape: bf16[3,16,32], index: 2, kind: input, shape index: {}]
  %s3 = inlined_call_operand.vmem [shape: f32[3,1,32], index: 3, kind: input, shape index: {}]
  %s4 = inlined_call_operand.hbm [shape: bf16[2,32,32], index: 4, kind: input, shape index: {}]
  %s5 = inlined_call_operand.vmem [shape: f32[2,1,32], index: 5, kind: input, shape index: {}]
  %s6 = inlined_call_operand.hbm [shape: bf16[3,32,128], index: 6, kind: input, shape index: {}]
  %s7 = inlined_call_operand.vmem [shape: f32[3,1,128], index: 7, kind: input, shape index: {}]
  %s8 = inlined_call_operand.vmem [shape: f32[8,128], index: 8, kind: output, shape index: {}]
  %s9 = sld [smem:[#allocation0]]
  $region50: #{mlp_forward.1} parent=0
    _
  %s11 = ssub.s32 1, %s9
  %s12 = scalar_select 0, %s11, %s9
  %13 = sst [smem:[#allocation3]] %s0
  $region1: #{mlp_forward.1} parent=0
    #allocation4 [shape = 'u8[4096]{0}', space=vmem, size = 0x1000, scoped, tag = 'input window, operand 2, single buffered']
    #allocation5 [shape = 's32[1]{0}', space=sflag, size = 0x4, scoped, tag = 'scoped memory for mlp_forward.1']
    #allocation6 [shape = 'u8[16384]{0}', space=vmem, size = 0x4000, scoped, tag = 'input window, operand 4, single buffered']
    #allocation7 [shape = 's32[1]{0}', space=sflag, size = 0x4, scoped, tag = 'scoped memory for mlp_forward.1']
    #allocation8 [shape = 'u8[8192]{0}', space=vmem, size = 0x2000, scoped, tag = 'input window, operand 6, single buffered']
    %14 = vsyncpa [#allocation5], 0
    %15 = vsyncpa [#allocation7], 0
    // Predicated region
    $region2: #{mlp_forward.1} parent=1 // pred_check
      _
    $region3: #{mlp_forward.1} parent=1 // pred_check_branch
      %17 = sbr.rel (0) target = $region5
    $region4: #{mlp_forward.1} parent=1 // pred_region
      _
    $region5: #{mlp_forward.1} parent=1 // pred_fallthru
      _
    // Predicated region
    $region6: #{mlp_forward.1} parent=1 // pred_check
      _
    $region7: #{mlp_forward.1} parent=1 // pred_check_branch
      %19 = sbr.rel (0) target = $region9
    $region8: #{mlp_forward.1} parent=1 // pred_region
      %s20 = sld [smem:[#allocation3]]
      %s22 = ssub.s32 128, 128
      %23 = vsyncadd [#allocation5], %s22
      %s24 = smul.addr %s20, 2
      %s25 = smul.addr %s24, 64
      %s26 = scalar_lea.hbm %s2, %s25
      %s27 = sshll.u32 [#allocation4], 4
      %s28 = int_to_ptr.vmem [resolvable:$true] %s27
      %33 = dma.hbm_to_vmem [thread:$0]  %s26, 128, %s28, [#allocation5], 64, 64, 4
    $region9: #{mlp_forward.1} parent=1 // pred_fallthru
      _
    // Predicated region
    $region10: #{mlp_forward.1} parent=1 // pred_check
      _
    $region11: #{mlp_forward.1} parent=1 // pred_check_branch
      %35 = sbr.rel (0) target = $region13
    $region12: #{mlp_forward.1} parent=1 // pred_region
      %s36 = sld [smem:[#allocation3]]
      %p37 = scmp.lt.s32.totalorder %s36, 2
      %s38 = scalar_select %p37, %s36, 2
      %s39 = scalar_lea.vmem %s3, %s38
      %s40 = sld [smem:[#allocation3]]
    $region13: #{mlp_forward.1} parent=1 // pred_fallthru
      _
    // Predicated region
    $region14: #{mlp_forward.1} parent=1 // pred_check
      _
    $region15: #{mlp_forward.1} parent=1 // pred_check_branch
      %42 = sbr.rel (0) target = $region17
    $region16: #{mlp_forward.1} parent=1 // pred_region
      %s44 = ssub.s32 512, 512
      %45 = vsyncadd [#allocation7], %s44
      %s46 = sshll.u32 [#allocation6], 4
      %s47 = int_to_ptr.vmem [resolvable:$true] %s46
      %52 = dma.hbm_to_vmem [thread:$0]  %s4, 512, %s47, [#allocation7], 64, 64, 4
    $region17: #{mlp_forward.1} parent=1 // pred_fallthru
      _
    // Predicated region
    $region18: #{mlp_forward.1} parent=1 // pred_check
      _
    $region19: #{mlp_forward.1} parent=1 // pred_check_branch
      %54 = sbr.rel (0) target = $region21
    $region20: #{mlp_forward.1} parent=1 // pred_region
      _
    $region21: #{mlp_forward.1} parent=1 // pred_fallthru
      _
    // Predicated region
    $region22: #{mlp_forward.1} parent=1 // pred_check
      _
    $region23: #{mlp_forward.1} parent=1 // pred_check_branch
      %56 = sbr.rel (0) target = $region25
    $region24: #{mlp_forward.1} parent=1 // pred_region
      %s57 = sld [smem:[#allocation3]]
      %s59 = ssub.s32 256, 256
      %60 = vsyncadd [#allocation7], %s59
      %s61 = smul.addr %s57, 4
      %s62 = smul.addr %s61, 64
      %s63 = scalar_lea.hbm %s6, %s62
      %s64 = sshll.u32 [#allocation8], 4
      %s65 = int_to_ptr.vmem [resolvable:$true] %s64
      %70 = dma.hbm_to_vmem [thread:$0]  %s63, 256, %s65, [#allocation7], 64, 64, 4
    $region25: #{mlp_forward.1} parent=1 // pred_fallthru
      _
    // Predicated region
    $region26: #{mlp_forward.1} parent=1 // pred_check
      _
    $region27: #{mlp_forward.1} parent=1 // pred_check_branch
      %72 = sbr.rel (0) target = $region29
    $region28: #{mlp_forward.1} parent=1 // pred_region
      %s73 = sld [smem:[#allocation3]]
      %p74 = scmp.lt.s32.totalorder %s73, 2
      %s75 = scalar_select %p74, %s73, 2
      %s76 = scalar_lea.vmem %s7, %s75
      %s77 = sld [smem:[#allocation3]]
    $region29: #{mlp_forward.1} parent=1 // pred_fallthru
      _
    // Predicated region
    $region30: #{mlp_forward.1} parent=1 // pred_check
      _
    $region31: #{mlp_forward.1} parent=1 // pred_check_branch
      %79 = sbr.rel (0) target = $region33
    $region32: #{mlp_forward.1} parent=1 // pred_region
      %80 = dma.done [#allocation5], 128
    $region33: #{mlp_forward.1} parent=1 // pred_fallthru
      _
    // Predicated region
    $region34: #{mlp_forward.1} parent=1 // pred_check
      _
    $region35: #{mlp_forward.1} parent=1 // pred_check_branch
      %82 = sbr.rel (0) target = $region37
    $region36: #{mlp_forward.1} parent=1 // pred_region
      %83 = dma.done [#allocation7], 512
    $region37: #{mlp_forward.1} parent=1 // pred_fallthru
      _
    // Predicated region
    $region38: #{mlp_forward.1} parent=1 // pred_check
      _
    $region39: #{mlp_forward.1} parent=1 // pred_check_branch
      %85 = sbr.rel (0) target = $region41
    $region40: #{mlp_forward.1} parent=1 // pred_region
      %86 = dma.done [#allocation7], 256
    $region41: #{mlp_forward.1} parent=1 // pred_fallthru
      _
    %s87 = sld [smem:[#allocation3]]
    %p88 = scmp.lt.s32.totalorder %s87, 2
    %s89 = scalar_select %p88, %s87, 2
    %s90 = scalar_lea.vmem %s3, %s89
    %s91 = sld [smem:[#allocation3]]
    %p92 = scmp.lt.s32.totalorder %s91, 2
    %s93 = scalar_select %p92, %s91, 2
    %s94 = scalar_lea.vmem %s7, %s93
    %s95 = sld [smem:[#allocation3]]
    %s96 = sld [smem:[#allocation3]]
    %p97 = scmp.lt.s32.totalorder %s96, 2
    %s98 = scalar_select %p97, %s96, 2
    %s99 = scalar_lea.vmem %s3, %s98
    %s100 = sld [smem:[#allocation3]]
    %s101 = sld [smem:[#allocation3]]
    %s102 = sld [smem:[#allocation3]]
    %p103 = scmp.lt.s32.totalorder %s102, 2
    %s104 = scalar_select %p103, %s102, 2
    %s105 = scalar_lea.vmem %s7, %s104
    %s106 = sld [smem:[#allocation3]]
    %v108 = vld [vmem:[%s1] sm:$0xf]
    %v109 = vld [vmem:[#allocation4] sm:$0xf]
    %v110 = vld [vmem:[#allocation4 + $0x4] sm:$0xf]
    %v111 = vld [vmem:[%s99] sm:$0x1]
    %v113 = vlaneseq
    %v114 = vshrl.u32 %v113, 7
    %v115 = vsub.s32 0, %v114
    %v116 = vrot.slane %v111, %v115
    %v120 = vunpack.c.l.b16 %v109
    %v121 = vunpack.c.l.b16 %v110
    %v122 = vpack.c.b16 %v121, %v120
    %vm124 = vcmask 130048
    %v126 = vsel %vm124, %v108, 0
    %128 = vmatprep.subr.bf16.mxu0 0
    %129 = vmatpush1.bf16.msra.mxu0 0
    %130 = vmatprep.subr.bf16.mxu0 0
    %131 = vmatpush1.bf16.msra.mxu0 0
    %132 = vmatprep.subr.bf16.mxu0 0
    %133 = vmatpush1.bf16.msra.mxu0 0
    %134 = vmatprep.subr.bf16.mxu0 0
    %135 = vmatpush1.bf16.msra.mxu0 0
    %136 = vmatprep.subr.bf16.mxu0 0
    %137 = vmatpush1.bf16.msra.mxu0 0
    %138 = vmatprep.subr.bf16.mxu0 0
    %139 = vmatpush1.bf16.msra.mxu0 0
    %140 = vmatprep.subr.bf16.mxu0 0
    %141 = vmatpush1.bf16.msra.mxu0 0
    %142 = vmatprep.subr.bf16.mxu0 0
    %143 = vmatpush1.bf16.msra.mxu0 %v122
    %144 = vmatprep.subr.bf16.mxu0 0
    %145 = vmatpush2.bf16.msra.mxu0 0
    %146 = vmatprep.subr.bf16.mxu0 0
    %147 = vmatpush2.bf16.msra.mxu0 0
    %148 = vmatprep.subr.bf16.mxu0 0
    %149 = vmatpush2.bf16.msra.mxu0 0
    %150 = vmatprep.subr.bf16.mxu0 0
    %151 = vmatpush2.bf16.msra.mxu0 0
    %152 = vmatprep.subr.bf16.mxu0 0
    %153 = vmatpush2.bf16.msra.mxu0 0
    %154 = vmatprep.subr.bf16.mxu0 0
    %155 = vmatpush2.bf16.msra.mxu0 0
    %156 = vmatprep.subr.bf16.mxu0 0
    %157 = vmatpush2.bf16.msra.mxu0 0
    %158 = vmatprep.subr.bf16.mxu0 0
    %159 = vmatpush2.bf16.msra.mxu0 0
    %160 = vmatprep.mubr.bf16.mxu0 0
    %161 = vmatmul.mubr.bf16.gmra.mxu0 %v126
    %v162 = vpop.f32.mrf.mxu0
    %v163 = vadd.f32 %v116, %v162
    %v164 = vpop.f32.mrf.mxu0
    %v165 = vpop.f32.mrf.mxu0
    %v166 = vpop.f32.mrf.mxu0
    %167 = vdwg.mxu0
    %v168 = vpack.c.bf16 %v163, %v163
    %v169 = vld [vmem:[#allocation6] sm:$0xf]
    %v170 = vld [vmem:[#allocation6 + $0x4] sm:$0xf]
    %v171 = vld [vmem:[#allocation6 + $0x8] sm:$0xf]
    %v172 = vld [vmem:[#allocation6 + $0xc] sm:$0xf]
    %v173 = vld [vmem:[%s5] sm:$0x1]
    %v175 = vlaneseq
    %v176 = vshrl.u32 %v175, 7
    %v177 = vsub.s32 0, %v176
    %v178 = vrot.slane %v173, %v177
    %v184 = vunpack.c.l.b16 %v169
    %v185 = vunpack.c.l.b16 %v170
    %v186 = vunpack.c.l.b16 %v171
    %v187 = vunpack.c.l.b16 %v172
    %v188 = vpack.c.b16 %v185, %v184
    %v189 = vpack.c.b16 %v187, %v186
    %vm192 = vcmask 261120
    %v194 = vsel %vm192, %v168, 0
    %196 = vmatprep.subr.bf16.mxu0 0
    %197 = vmatpush1.bf16.msra.mxu0 0
    %198 = vmatprep.subr.bf16.mxu0 0
    %199 = vmatpush1.bf16.msra.mxu0 0
    %200 = vmatprep.subr.bf16.mxu0 0
    %201 = vmatpush1.bf16.msra.mxu0 0
    %202 = vmatprep.subr.bf16.mxu0 0
    %203 = vmatpush1.bf16.msra.mxu0 0
    %204 = vmatprep.subr.bf16.mxu0 0
    %205 = vmatpush1.bf16.msra.mxu0 0
    %206 = vmatprep.subr.bf16.mxu0 0
    %207 = vmatpush1.bf16.msra.mxu0 0
    %208 = vmatprep.subr.bf16.mxu0 0
    %209 = vmatpush1.bf16.msra.mxu0 %v189
    %210 = vmatprep.subr.bf16.mxu0 0
    %211 = vmatpush1.bf16.msra.mxu0 %v188
    %212 = vmatprep.subr.bf16.mxu0 0
    %213 = vmatpush2.bf16.msra.mxu0 0
    %214 = vmatprep.subr.bf16.mxu0 0
    %215 = vmatpush2.bf16.msra.mxu0 0
    %216 = vmatprep.subr.bf16.mxu0 0
    %217 = vmatpush2.bf16.msra.mxu0 0
    %218 = vmatprep.subr.bf16.mxu0 0
    %219 = vmatpush2.bf16.msra.mxu0 0
    %220 = vmatprep.subr.bf16.mxu0 0
    %221 = vmatpush2.bf16.msra.mxu0 0
    %222 = vmatprep.subr.bf16.mxu0 0
    %223 = vmatpush2.bf16.msra.mxu0 0
    %224 = vmatprep.subr.bf16.mxu0 0
    %225 = vmatpush2.bf16.msra.mxu0 0
    %226 = vmatprep.subr.bf16.mxu0 0
    %227 = vmatpush2.bf16.msra.mxu0 0
    %228 = vmatprep.mubr.bf16.mxu0 0
    %229 = vmatmul.mubr.bf16.gmra.mxu0 %v194
    %v230 = vpop.f32.mrf.mxu0
    %v231 = vadd.f32 %v178, %v230
    %v232 = vpop.f32.mrf.mxu0
    %v233 = vpop.f32.mrf.mxu0
    %v234 = vpop.f32.mrf.mxu0
    %235 = vdwg.mxu0
    %v236 = vmax.f32 %v231, 0.0
    %v237 = vpack.c.bf16 %v236, %v236
    %s238 = scalar_lea.vmem [#allocation6], 16
    %v239 = vld [vmem:[%s238] sm:$0xf]
    %v240 = vld [vmem:[%s238 + $0x4] sm:$0xf]
    %v241 = vld [vmem:[%s238 + $0x8] sm:$0xf]
    %v242 = vld [vmem:[%s238 + $0xc] sm:$0xf]
    %s243 = scalar_lea.vmem %s5, 1
    %v244 = vld [vmem:[%s243] sm:$0x1]
    %v246 = vlaneseq
    %v247 = vshrl.u32 %v246, 7
    %v248 = vsub.s32 0, %v247
    %v249 = vrot.slane %v244, %v248
    %v255 = vunpack.c.l.b16 %v239
    %v256 = vunpack.c.l.b16 %v240
    %v257 = vunpack.c.l.b16 %v241
    %v258 = vunpack.c.l.b16 %v242
    %v259 = vpack.c.b16 %v256, %v255
    %v260 = vpack.c.b16 %v258, %v257
    %v264 = vsel %vm192, %v237, 0
    %266 = vmatprep.subr.bf16.mxu0 0
    %267 = vmatpush1.bf16.msra.mxu0 0
    %268 = vmatprep.subr.bf16.mxu0 0
    %269 = vmatpush1.bf16.msra.mxu0 0
    %270 = vmatprep.subr.bf16.mxu0 0
    %271 = vmatpush1.bf16.msra.mxu0 0
    %272 = vmatprep.subr.bf16.mxu0 0
    %273 = vmatpush1.bf16.msra.mxu0 0
    %274 = vmatprep.subr.bf16.mxu0 0
    %275 = vmatpush1.bf16.msra.mxu0 0
    %276 = vmatprep.subr.bf16.mxu0 0
    %277 = vmatpush1.bf16.msra.mxu0 0
    %278 = vmatprep.subr.bf16.mxu0 0
    %279 = vmatpush1.bf16.msra.mxu0 %v260
    %280 = vmatprep.subr.bf16.mxu0 0
    %281 = vmatpush1.bf16.msra.mxu0 %v259
    %282 = vmatprep.subr.bf16.mxu0 0
    %283 = vmatpush2.bf16.msra.mxu0 0
    %284 = vmatprep.subr.bf16.mxu0 0
    %285 = vmatpush2.bf16.msra.mxu0 0
    %286 = vmatprep.subr.bf16.mxu0 0
    %287 = vmatpush2.bf16.msra.mxu0 0
    %288 = vmatprep.subr.bf16.mxu0 0
    %289 = vmatpush2.bf16.msra.mxu0 0
    %290 = vmatprep.subr.bf16.mxu0 0
    %291 = vmatpush2.bf16.msra.mxu0 0
    %292 = vmatprep.subr.bf16.mxu0 0
    %293 = vmatpush2.bf16.msra.mxu0 0
    %294 = vmatprep.subr.bf16.mxu0 0
    %295 = vmatpush2.bf16.msra.mxu0 0
    %296 = vmatprep.subr.bf16.mxu0 0
    %297 = vmatpush2.bf16.msra.mxu0 0
    %298 = vmatprep.mubr.bf16.mxu0 0
    %299 = vmatmul.mubr.bf16.gmra.mxu0 %v264
    %v300 = vpop.f32.mrf.mxu0
    %v301 = vadd.f32 %v249, %v300
    %v302 = vpop.f32.mrf.mxu0
    %v303 = vpop.f32.mrf.mxu0
    %v304 = vpop.f32.mrf.mxu0
    %305 = vdwg.mxu0
    %v306 = vmax.f32 %v301, 0.0
    %v307 = vpack.c.bf16 %v306, %v306
    %v308 = vld [vmem:[#allocation8] sm:$0xf]
    %v309 = vld [vmem:[#allocation8 + $0x4] sm:$0xf]
    %v310 = vld [vmem:[#allocation8 + $0x8] sm:$0xf]
    %v311 = vld [vmem:[#allocation8 + $0xc] sm:$0xf]
    %v312 = vld [vmem:[%s105] sm:$0x1]
    %v314 = vlaneseq
    %v315 = vshrl.u32 %v314, 7
    %v316 = vsub.s32 0, %v315
    %v317 = vrot.slane %v312, %v316
    %v323 = vunpack.c.l.b16 %v308
    %v324 = vunpack.c.l.b16 %v309
    %v325 = vunpack.c.l.b16 %v310
    %v326 = vunpack.c.l.b16 %v311
    %v327 = vpack.c.b16 %v324, %v323
    %v328 = vpack.c.b16 %v326, %v325
    %v332 = vsel %vm192, %v307, 0
    %334 = vmatprep.subr.bf16.mxu0 0
    %335 = vmatpush1.bf16.msra.mxu0 0
    %336 = vmatprep.subr.bf16.mxu0 0
    %337 = vmatpush1.bf16.msra.mxu0 0
    %338 = vmatprep.subr.bf16.mxu0 0
    %339 = vmatpush1.bf16.msra.mxu0 0
    %340 = vmatprep.subr.bf16.mxu0 0
    %341 = vmatpush1.bf16.msra.mxu0 0
    %342 = vmatprep.subr.bf16.mxu0 0
    %343 = vmatpush1.bf16.msra.mxu0 0
    %344 = vmatprep.subr.bf16.mxu0 0
    %345 = vmatpush1.bf16.msra.mxu0 0
    %346 = vmatprep.subr.bf16.mxu0 0
    %347 = vmatpush1.bf16.msra.mxu0 %v328
    %348 = vmatprep.subr.bf16.mxu0 0
    %349 = vmatpush1.bf16.msra.mxu0 %v327
    %350 = vmatprep.subr.bf16.mxu0 0
    %351 = vmatpush2.bf16.msra.mxu0 0
    %352 = vmatprep.subr.bf16.mxu0 0
    %353 = vmatpush2.bf16.msra.mxu0 0
    %354 = vmatprep.subr.bf16.mxu0 0
    %355 = vmatpush2.bf16.msra.mxu0 0
    %356 = vmatprep.subr.bf16.mxu0 0
    %357 = vmatpush2.bf16.msra.mxu0 0
    %358 = vmatprep.subr.bf16.mxu0 0
    %359 = vmatpush2.bf16.msra.mxu0 0
    %360 = vmatprep.subr.bf16.mxu0 0
    %361 = vmatpush2.bf16.msra.mxu0 0
    %362 = vmatprep.subr.bf16.mxu0 0
    %363 = vmatpush2.bf16.msra.mxu0 0
    %364 = vmatprep.subr.bf16.mxu0 0
    %365 = vmatpush2.bf16.msra.mxu0 0
    %366 = vmatprep.mubr.bf16.mxu0 0
    %367 = vmatmul.mubr.bf16.gmra.mxu0 %v332
    %v368 = vpop.f32.mrf.mxu0
    %v369 = vadd.f32 %v317, %v368
    %v370 = vpop.f32.mrf.mxu0
    %v371 = vpop.f32.mrf.mxu0
    %v372 = vpop.f32.mrf.mxu0
    %373 = vdwg.mxu0
    %374 = vst [vmem:[%s8] sm:$0xff] %v369
    // Predicated region
    $region42: #{mlp_forward.1} parent=1 // pred_check
      _
    $region43: #{mlp_forward.1} parent=1 // pred_check_branch
      %376 = sbr.rel (0) target = $region45
    $region44: #{mlp_forward.1} parent=1 // pred_region
      _
    $region45: #{mlp_forward.1} parent=1 // pred_fallthru
      _
    // Predicated region
    $region46: #{mlp_forward.1} parent=1 // pred_check
      _
    $region47: #{mlp_forward.1} parent=1 // pred_check_branch
      %378 = sbr.rel (0) target = $region49
    $region48: #{mlp_forward.1} parent=1 // pred_region
      _
    $region49: #{mlp_forward.1} parent=1 // pred_fallthru
      _
    %379 = vsyncpa [#allocation5], 1
    %380 = vsyncpa [#allocation7], 1

</llo_original>
